<compile_context>
chip_gen: v6e
topology: v6e:2x2x1
jax: 0.10.0
libtpu: 0.0.40
codegen_flags: <defaults>
</compile_context>

<pallas_src>
import math

import jax
import jax.numpy as jnp
import numpy as np
from jax.experimental import pallas as pl
from jax.experimental.pallas import tpu as pltpu

EPS = 1e-6


def audio_emb_kernel(x_ref, w_ref, g_ref, b_ref, pe_ref, o_ref):
    # x_ref : (rows, F)    w_ref : (F, D)     g_ref/b_ref : (1, D)  (sqrt(D) folded in)
    # pe_ref: (tl, 1, D)   o_ref : (rows, D)  with rows == tl * B
    rows, _ = x_ref.shape
    tl, _, D = pe_ref.shape
    B = rows // tl

    # Linear (no bias) on the MXU; always accumulate in f32 (inputs may be bf16).
    y = jnp.dot(x_ref[...], w_ref[...], preferred_element_type=jnp.float32)

    # LayerNorm over the last dim (biased variance, like torch.nn.LayerNorm).
    # One-pass statistics: var = E[y^2] - E[y]^2 -> both XLU reductions are
    # independent (no serialization through a centered intermediate).
    mean = jnp.mean(y, axis=-1, keepdims=True)
    mean_sq = jnp.mean(y * y, axis=-1, keepdims=True)
    var = mean_sq - mean * mean
    yn = (y - mean) * jax.lax.rsqrt(var + EPS)

    # Positional encoding: flat row r belongs to position r // B, so expand the
    # (tl, 1, D) pe tile across the batch dim once per grid step.
    pe = jnp.broadcast_to(pe_ref[...], (tl, B, D)).reshape(rows, D)

    # gamma/beta already carry the * sqrt(D) scale.
    o_ref[...] = (yn * g_ref[...] + b_ref[...] + pe).astype(o_ref.dtype)
    # TODO(synk): dropout omitted (p=0 / eval mode -> identity).


def make_positional_encoding(max_len, dim):
    position = jnp.arange(max_len, dtype=jnp.float32)[:, None]
    div_term = jnp.exp(
        jnp.arange(0, dim, 2, dtype=jnp.float32) * -(math.log(10000.0) / dim)
    )
    ang = position * div_term                       # (max_len, dim//2)
    pe = jnp.zeros((max_len, dim), dtype=jnp.float32)
    pe = pe.at[:, 0::2].set(jnp.sin(ang))
    pe = pe.at[:, 1::2].set(jnp.cos(ang))
    return pe[:, None, :]                           # (max_len, 1, dim)


def _auto_tile_len(L, B, F, D, in_itemsize, out_itemsize, requested):
    """Cap the number of len-positions per grid step to a ~24 MiB VMEM budget."""
    # Double-buffered src + out tiles plus the pe tile, per len-position.
    per_pos = 2 * B * (F * in_itemsize + D * out_itemsize) + 2 * D * 4
    budget = 24 * 1024 * 1024
    cap = max(8, budget // max(per_pos, 1))
    tl = int(min(requested, cap, max(L, 1)))
    return max(8, (tl // 8) * 8)    # multiple of 8 -> tl*B rows sublane-aligned


def audio_embeddings(src, w_t, gamma, beta, pe, *, tile_len=256,
                     compute_dtype=None, out_dtype=None):
    """src: (L, B, F); w_t: (F, D) = W.T of the PyTorch (D, F) Linear weight;
    gamma/beta: (D,); pe: (max_len, 1, D) sinusoidal table (float32)."""
    L, B, F = src.shape
    D = w_t.shape[1]
    assert pe.shape[0] >= L, "positional-encoding table shorter than sequence"
    compute_dtype = compute_dtype or src.dtype
    out_dtype = out_dtype or src.dtype

    tl = _auto_tile_len(L, B, F, D, jnp.dtype(compute_dtype).itemsize,
                        jnp.dtype(out_dtype).itemsize, tile_len)
    n_blocks = (L + tl - 1) // tl
    L_pad = n_blocks * tl
    rows = tl * B

    # Pad the len remainder (padded rows are computed then dropped; LN on a
    # zero row is finite because of +eps).
    src_p = src if L_pad == L else jnp.pad(src, ((0, L_pad - L), (0, 0), (0, 0)))
    pe_p = pe[:L].astype(jnp.float32)
    if L_pad != L:
        pe_p = jnp.pad(pe_p, ((0, L_pad - L), (0, 0), (0, 0)))

    # Flatten (len, batch) -> rows: contiguous reshape, no HBM data movement.
    x2 = src_p.reshape(L_pad * B, F).astype(compute_dtype)
    w2 = w_t.astype(compute_dtype)

    # Fold the * sqrt(D) positional-encoding scale into gamma/beta (f32, once).
    scale = jnp.float32(math.sqrt(D))
    g2 = (gamma.astype(jnp.float32) * scale).reshape(1, D)
    b2 = (beta.astype(jnp.float32) * scale).reshape(1, D)

    out_flat = pl.pallas_call(
        audio_emb_kernel,
        out_shape=jax.ShapeDtypeStruct((L_pad * B, D), out_dtype),
        grid_spec=pltpu.PrefetchScalarGridSpec(
            num_scalar_prefetch=0,
            grid=(n_blocks,),
            in_specs=[
                pl.BlockSpec((rows, F), lambda i: (i, 0)),       # src row tile
                pl.BlockSpec((F, D), lambda i: (0, 0)),          # W^T (grid-invariant)
                pl.BlockSpec((1, D), lambda i: (0, 0)),          # gamma * sqrt(D)
                pl.BlockSpec((1, D), lambda i: (0, 0)),          # beta  * sqrt(D)
                pl.BlockSpec((tl, 1, D), lambda i: (i, 0, 0)),   # pe tile
            ],
            out_specs=pl.BlockSpec((rows, D), lambda i: (i, 0)),
        ),
        compiler_params=pltpu.CompilerParams(
            dimension_semantics=("parallel",),       # len tiles shard across TCs
            vmem_limit_bytes=32 * 1024 * 1024,       # tile budget sized under this
        ),
    )(x2, w2, g2, b2, pe_p)

    out = out_flat.reshape(L_pad, B, D)
    return out[:L] if L_pad != L else out


def reference(src, w_t, gamma, beta, pe):
    L, B, F = src.shape
    D = w_t.shape[1]
    y = src.reshape(L * B, F) @ w_t
    mean = y.mean(-1, keepdims=True)
    var = ((y - mean) ** 2).mean(-1, keepdims=True)
    yn = (y - mean) / jnp.sqrt(var + EPS) * gamma + beta
    yn = yn.reshape(L, B, D)
    return yn * math.sqrt(D) + pe[:L]


if __name__ == "__main__":
    # Small shapes consistent with AudioEmbeddings.forward:
    #   src (len, batch, n_feats) -> out (len, batch, embedding_size)
    # D=128 keeps the output lane-dense; L=50 exercises the remainder/pad path.
    L, B, F, D = 50, 2, 16, 128
    max_len = 128

    key = jax.random.PRNGKey(0)
    k_src, k_w = jax.random.split(key)
    src = jax.random.normal(k_src, (L, B, F), dtype=jnp.float32)
    # PyTorch Linear weight is (D, F); the kernel consumes its transpose (F, D).
    w = jax.random.normal(k_w, (D, F), dtype=jnp.float32) / math.sqrt(F)
    w_t = w.T
    gamma = jnp.ones((D,), dtype=jnp.float32)       # LayerNorm defaults
    beta = jnp.zeros((D,), dtype=jnp.float32)
    pe = make_positional_encoding(max_len, D)

    # f32 path.
    out = jax.block_until_ready(
        audio_embeddings(src, w_t, gamma, beta, pe, tile_len=16))
    ref = reference(src, w_t, gamma, beta, pe)
    np.testing.assert_allclose(np.asarray(out), np.asarray(ref),
                               rtol=1e-5, atol=1e-4)

    # bf16 compute path (bf16 src/W on the MXU, f32 accumulation + f32 LN stats),
    # compared against the reference evaluated on bf16-rounded inputs.
    out_b = jax.block_until_ready(
        audio_embeddings(src, w_t, gamma, beta, pe, tile_len=16,
                         compute_dtype=jnp.bfloat16, out_dtype=jnp.float32))
    src_b = src.astype(jnp.bfloat16).astype(jnp.float32)
    w_t_b = w_t.astype(jnp.bfloat16).astype(jnp.float32)
    ref_b = reference(src_b, w_t_b, gamma, beta, pe)
    np.testing.assert_allclose(np.asarray(out_b), np.asarray(ref_b),
                               rtol=1e-2, atol=1e-2)

    print("KERNEL_OK")
</pallas_src>

<mosaic_0001>
module attributes {stable_mosaic.version = 11 : i64} {
  func.func @audio_emb_kernel(%arg0: i32, %arg1: memref<32x16xf32, #tpu.memory_space<vmem>>, %arg2: memref<16x128xf32, #tpu.memory_space<vmem>>, %arg3: memref<1x128xf32, #tpu.memory_space<vmem>>, %arg4: memref<1x128xf32, #tpu.memory_space<vmem>>, %arg5: memref<16x1x128xf32, #tpu.memory_space<vmem>>, %arg6: memref<32x128xf32, #tpu.memory_space<vmem>>) attributes {dimension_semantics = [#tpu.dimension_semantics<parallel>], iteration_bounds = array<i64: 4>, scalar_prefetch = 0 : i64, scratch_operands = 0 : i64, tpu.core_type = #tpu.core_type<tc>, window_params = [{transform_indices = @transform_0, window_bounds = array<i64: 32, 16>}, {pipeline_mode = #tpu.pipeline_mode<synchronous>, transform_indices = @transform_1, window_bounds = array<i64: 16, 128>}, {pipeline_mode = #tpu.pipeline_mode<synchronous>, transform_indices = @transform_2, window_bounds = array<i64: 1, 128>}, {pipeline_mode = #tpu.pipeline_mode<synchronous>, transform_indices = @transform_3, window_bounds = array<i64: 1, 128>}, {transform_indices = @transform_4, window_bounds = array<i64: 16, 1, 128>}, {transform_indices = @transform_5, window_bounds = array<i64: 32, 128>}]} {
    %c0 = arith.constant 0 : index
    %c0_0 = arith.constant 0 : index
    %0 = vector.load %arg1[%c0, %c0_0] : memref<32x16xf32, #tpu.memory_space<vmem>>, vector<32x16xf32>
    %c0_1 = arith.constant 0 : index
    %c0_2 = arith.constant 0 : index
    %1 = vector.load %arg2[%c0_1, %c0_2] : memref<16x128xf32, #tpu.memory_space<vmem>>, vector<16x128xf32>
    %cst = arith.constant dense<0.000000e+00> : vector<32x128xf32>
    %2 = tpu.matmul %0, %1, %cst {dimension_numbers = #tpu.dot_dimension_numbers<[1], [0], [0], [1], [0, 0, 1, 1], [], []>} : vector<32x16xf32>, vector<16x128xf32>, vector<32x128xf32> -> vector<32x128xf32>
    %cst_3 = arith.constant dense<0.000000e+00> : vector<32xf32>
    %3 = vector.multi_reduction <add>, %2, %cst_3 [1] : vector<32x128xf32> to vector<32xf32>
    %4 = vector.shape_cast %3 : vector<32xf32> to vector<32x1xf32>
    %cst_4 = arith.constant 1.280000e+02 : f32
    %5 = vector.broadcast %cst_4 : f32 to vector<32x1xf32>
    %6 = arith.divf %4, %5 : vector<32x1xf32>
    %7 = arith.mulf %2, %2 : vector<32x128xf32>
    %cst_5 = arith.constant dense<0.000000e+00> : vector<32xf32>
    %8 = vector.multi_reduction <add>, %7, %cst_5 [1] : vector<32x128xf32> to vector<32xf32>
    %9 = vector.shape_cast %8 : vector<32xf32> to vector<32x1xf32>
    %cst_6 = arith.constant 1.280000e+02 : f32
    %10 = vector.broadcast %cst_6 : f32 to vector<32x1xf32>
    %11 = arith.divf %9, %10 : vector<32x1xf32>
    %12 = arith.mulf %6, %6 : vector<32x1xf32>
    %13 = arith.subf %11, %12 : vector<32x1xf32>
    %14 = vector.broadcast %6 : vector<32x1xf32> to vector<32x128xf32>
    %15 = arith.subf %2, %14 : vector<32x128xf32>
    %cst_7 = arith.constant 9.99999997E-7 : f32
    %16 = vector.broadcast %cst_7 : f32 to vector<32x1xf32>
    %17 = arith.addf %13, %16 : vector<32x1xf32>
    %18 = math.rsqrt %17 : vector<32x1xf32>
    %19 = vector.broadcast %18 : vector<32x1xf32> to vector<32x128xf32>
    %20 = arith.mulf %15, %19 : vector<32x128xf32>
    %c0_8 = arith.constant 0 : index
    %c0_9 = arith.constant 0 : index
    %c0_10 = arith.constant 0 : index
    %21 = vector.load %arg5[%c0_8, %c0_9, %c0_10] : memref<16x1x128xf32, #tpu.memory_space<vmem>>, vector<16x1x128xf32>
    %22 = vector.shape_cast %21 : vector<16x1x128xf32> to vector<16x1x128xf32>
    %23 = vector.broadcast %22 : vector<16x1x128xf32> to vector<16x2x128xf32>
    %24 = vector.shape_cast %23 : vector<16x2x128xf32> to vector<32x128xf32>
    %c0_11 = arith.constant 0 : index
    %c0_12 = arith.constant 0 : index
    %25 = vector.load %arg3[%c0_11, %c0_12] : memref<1x128xf32, #tpu.memory_space<vmem>>, vector<1x128xf32>
    %26 = vector.broadcast %25 : vector<1x128xf32> to vector<32x128xf32>
    %27 = arith.mulf %20, %26 : vector<32x128xf32>
    %c0_13 = arith.constant 0 : index
    %c0_14 = arith.constant 0 : index
    %28 = vector.load %arg4[%c0_13, %c0_14] : memref<1x128xf32, #tpu.memory_space<vmem>>, vector<1x128xf32>
    %29 = vector.broadcast %28 : vector<1x128xf32> to vector<32x128xf32>
    %30 = arith.addf %27, %29 : vector<32x128xf32>
    %31 = arith.addf %30, %24 : vector<32x128xf32>
    %c0_15 = arith.constant 0 : index
    %c0_16 = arith.constant 0 : index
    %32 = vector.load %arg6[%c0_15, %c0_16] : memref<32x128xf32, #tpu.memory_space<vmem>>, vector<32x128xf32>
    tpu.vector_store %arg6[%c0_15, %c0_16], %31 {strides = array<i32>} : memref<32x128xf32, #tpu.memory_space<vmem>>, vector<32x128xf32>,
    return
  }
  func.func @transform_0(%arg0: i32) -> (i32, i32) {
    %c0_i32 = arith.constant 0 : i32
    %c0_i32_0 = arith.constant 0 : i32
    return %arg0, %c0_i32 : i32, i32
  }
  func.func @transform_1(%arg0: i32) -> (i32, i32) {
    %c0_i32 = arith.constant 0 : i32
    %c0_i32_0 = arith.constant 0 : i32
    %c0_i32_1 = arith.constant 0 : i32
    return %c0_i32, %c0_i32_0 : i32, i32
  }
  func.func @transform_2(%arg0: i32) -> (i32, i32) {
    %c0_i32 = arith.constant 0 : i32
    %c0_i32_0 = arith.constant 0 : i32
    %c0_i32_1 = arith.constant 0 : i32
    return %c0_i32, %c0_i32_0 : i32, i32
  }
  func.func @transform_3(%arg0: i32) -> (i32, i32) {
    %c0_i32 = arith.constant 0 : i32
    %c0_i32_0 = arith.constant 0 : i32
    %c0_i32_1 = arith.constant 0 : i32
    return %c0_i32, %c0_i32_0 : i32, i32
  }
  func.func @transform_4(%arg0: i32) -> (i32, i32, i32) {
    %c0_i32 = arith.constant 0 : i32
    %c0_i32_0 = arith.constant 0 : i32
    %c0_i32_1 = arith.constant 0 : i32
    return %arg0, %c0_i32, %c0_i32_0 : i32, i32, i32
  }
  func.func @transform_5(%arg0: i32) -> (i32, i32) {
    %c0_i32 = arith.constant 0 : i32
    %c0_i32_0 = arith.constant 0 : i32
    return %arg0, %c0_i32 : i32, i32
  }
}

</mosaic_0001>

<llo_original>
// kernel: tpu_custom_call.1
$region0: #{tpu_custom_call.1}
  #allocation0 [shape = 'u32[]', space=smem, size = 0x4, offset = 0x4, fixed_abs, tag = 'smem constant byte address 0x4 - core index']
  #allocation1 [shape = 'u32[144,128]{1,0:T(1,128)}', space=vmem, size = 0x12000, scoped, tag = 'internal scratch']
  %s0 = inlined_call_operand.vmem [shape: f32[128,16], index: 0, kind: input, shape index: {}]
  %s1 = inlined_call_operand.vmem [shape: f32[16,128], index: 1, kind: input, shape index: {}]
  %s2 = inlined_call_operand.vmem [shape: f32[1,128], index: 2, kind: input, shape index: {}]
  %s3 = inlined_call_operand.vmem [shape: f32[1,128], index: 3, kind: input, shape index: {}]
  %s4 = inlined_call_operand.vmem [shape: f32[64,1,128], index: 4, kind: input, shape index: {}]
  %s5 = inlined_call_operand.hbm [shape: f32[128,128], index: 5, kind: output, shape index: {}]
  %s6 = sld [smem:[#allocation0]]
  $region53: #{tpu_custom_call.1} parent=0
    _
  %s8 = ssub.s32 1, %s6
  %s9 = scalar_select 0, %s8, %s6
  $region1: #{tpu_custom_call.1} parent=0
    #allocation2 [shape = 'u8[32768]{0}', space=vmem, size = 0x8000, scoped, tag = 'output window, operand 0']
    #allocation3 [shape = 's32[2]{0}', space=sflag, size = 0x8, scoped, tag = 'scoped memory for tpu_custom_call.1']
    %10 = vsyncpa [#allocation3], 0
    %s11 = scalar_lea.sflag [#allocation3], 1
    %12 = vsyncpa %s11, 0
    loop: start=0, step=1, limit=6
    $region2: #{tpu_custom_call.1} parent=1 // loop_pre_header
      _
    $region3: #{tpu_custom_call.1} parent=1 // loop_header
      %s14 = sphi 0, %s18
      %p15 = scmp.ge.s32.totalorder %s14, 6
      %s24 = sphi 0, %s26
      %s27 = sphi 0, %s24
      %s28 = sphi 0, %s27
      %s44 = sphi 0, %s28
      %s48 = sphi 0, %s48
      %s50 = sphi 0, %s48
      %s51 = sphi 0, %s50
      %s65 = sphi 0, %s51
      %s69 = sphi 0, %s69
      %s71 = sphi 0, %s69
      %s72 = sphi 0, %s71
      %s86 = sphi 0, %s72
      %s90 = sphi 0, %s90
      %s92 = sphi 0, %s90
      %s93 = sphi 0, %s92
      %s107 = sphi 0, %s93
      %s113 = sphi 0, %s115
      %s116 = sphi 0, %s113
      %s117 = sphi 0, %s116
      %s133 = sphi 0, %s117
      %s139 = sphi 0, %s141
      %s142 = sphi 0, %s139
      %s143 = sphi 0, %s142
      %s159 = sphi 0, %s143
    $region4: #{tpu_custom_call.1} parent=1 // loop_header_branch
      %17 = sbr.rel (%p15) target = $region8
    $region5: #{tpu_custom_call.1} parent=1 // loop_body
      %s19 = ssub.s32 %s14, 1
      %s20 = ssub.s32 %s14, 2
      %s21 = sadd.s32 %s14, 1
      %s22 = ssub.s32 %s14, %s21
      %p23 = scmp.eq.s32.totalorder %s22, 0
      %s25 = sadd.s32 %s24, 1
      %s26 = scalar_select %p23, %s24, %s25
      %p29 = pneg %p23
      %p30 = scmp.eq.s32.totalorder %s14, 3
      %p31 = por %p29, %p30
      %p32 = scmp.ne.s32.totalorder %s24, %s27
      %p33 = scmp.eq.s32.totalorder %s14, 0
      %p34 = por %p32, %p33
      %p35 = scmp.ne.s32.totalorder %s24, %s27
      %p36 = scmp.eq.s32.totalorder %s19, 3
      %p37 = por %p35, %p36
      %p38 = scmp.ne.s32.totalorder %s27, %s28
      %p39 = scmp.eq.s32.totalorder %s19, 0
      %p40 = por %p38, %p39
      %p41 = scmp.ne.s32.totalorder %s27, %s28
      %p42 = scmp.eq.s32.totalorder %s20, 3
      %p43 = por %p41, %p42
      %p45 = scmp.ne.s32.totalorder %s28, %s44
      %p46 = scmp.eq.s32.totalorder %s20, 0
      %p47 = por %p45, %p46
      %s49 = sadd.s32 %s48, 1
      %p52 = scmp.eq.s32.totalorder %s14, 3
      %p53 = scmp.ne.s32.totalorder %s48, %s50
      %p54 = scmp.eq.s32.totalorder %s14, 0
      %p55 = por %p53, %p54
      %p56 = scmp.ne.s32.totalorder %s48, %s50
      %p57 = scmp.eq.s32.totalorder %s19, 3
      %p58 = por %p56, %p57
      %p59 = scmp.ne.s32.totalorder %s50, %s51
      %p60 = scmp.eq.s32.totalorder %s19, 0
      %p61 = por %p59, %p60
      %p62 = scmp.ne.s32.totalorder %s50, %s51
      %p63 = scmp.eq.s32.totalorder %s20, 3
      %p64 = por %p62, %p63
      %p66 = scmp.ne.s32.totalorder %s51, %s65
      %p67 = scmp.eq.s32.totalorder %s20, 0
      %p68 = por %p66, %p67
      %s70 = sadd.s32 %s69, 1
      %p73 = scmp.eq.s32.totalorder %s14, 3
      %p74 = scmp.ne.s32.totalorder %s69, %s71
      %p75 = scmp.eq.s32.totalorder %s14, 0
      %p76 = por %p74, %p75
      %p77 = scmp.ne.s32.totalorder %s69, %s71
      %p78 = scmp.eq.s32.totalorder %s19, 3
      %p79 = por %p77, %p78
      %p80 = scmp.ne.s32.totalorder %s71, %s72
      %p81 = scmp.eq.s32.totalorder %s19, 0
      %p82 = por %p80, %p81
      %p83 = scmp.ne.s32.totalorder %s71, %s72
      %p84 = scmp.eq.s32.totalorder %s20, 3
      %p85 = por %p83, %p84
      %p87 = scmp.ne.s32.totalorder %s72, %s86
      %p88 = scmp.eq.s32.totalorder %s20, 0
      %p89 = por %p87, %p88
      %s91 = sadd.s32 %s90, 1
      %p94 = scmp.eq.s32.totalorder %s14, 3
      %p95 = scmp.ne.s32.totalorder %s90, %s92
      %p96 = scmp.eq.s32.totalorder %s14, 0
      %p97 = por %p95, %p96
      %p98 = scmp.ne.s32.totalorder %s90, %s92
      %p99 = scmp.eq.s32.totalorder %s19, 3
      %p100 = por %p98, %p99
      %p101 = scmp.ne.s32.totalorder %s92, %s93
      %p102 = scmp.eq.s32.totalorder %s19, 0
      %p103 = por %p101, %p102
      %p104 = scmp.ne.s32.totalorder %s92, %s93
      %p105 = scmp.eq.s32.totalorder %s20, 3
      %p106 = por %p104, %p105
      %p108 = scmp.ne.s32.totalorder %s93, %s107
      %p109 = scmp.eq.s32.totalorder %s20, 0
      %p110 = por %p108, %p109
      %s111 = ssub.s32 %s14, %s21
      %p112 = scmp.eq.s32.totalorder %s111, 0
      %s114 = sadd.s32 %s113, 1
      %s115 = scalar_select %p112, %s113, %s114
      %p118 = pneg %p112
      %p119 = scmp.eq.s32.totalorder %s14, 3
      %p120 = por %p118, %p119
      %p121 = scmp.ne.s32.totalorder %s113, %s116
      %p122 = scmp.eq.s32.totalorder %s14, 0
      %p123 = por %p121, %p122
      %p124 = scmp.ne.s32.totalorder %s113, %s116
      %p125 = scmp.eq.s32.totalorder %s19, 3
      %p126 = por %p124, %p125
      %p127 = scmp.ne.s32.totalorder %s116, %s117
      %p128 = scmp.eq.s32.totalorder %s19, 0
      %p129 = por %p127, %p128
      %p130 = scmp.ne.s32.totalorder %s116, %s117
      %p131 = scmp.eq.s32.totalorder %s20, 3
      %p132 = por %p130, %p131
      %p134 = scmp.ne.s32.totalorder %s117, %s133
      %p135 = scmp.eq.s32.totalorder %s20, 0
      %p136 = por %p134, %p135
      %s137 = ssub.s32 %s14, %s21
      %p138 = scmp.eq.s32.totalorder %s137, 0
      %s140 = sadd.s32 %s139, 1
      %s141 = scalar_select %p138, %s139, %s140
      %p144 = pneg %p138
      %p145 = scmp.eq.s32.totalorder %s14, 3
      %p146 = por %p144, %p145
      %p147 = scmp.ne.s32.totalorder %s139, %s142
      %p148 = scmp.eq.s32.totalorder %s14, 0
      %p149 = por %p147, %p148
      %p150 = scmp.ne.s32.totalorder %s139, %s142
      %p151 = scmp.eq.s32.totalorder %s19, 3
      %p152 = por %p150, %p151
      %p153 = scmp.ne.s32.totalorder %s142, %s143
      %p154 = scmp.eq.s32.totalorder %s19, 0
      %p155 = por %p153, %p154
      %p156 = scmp.ne.s32.totalorder %s142, %s143
      %p157 = scmp.eq.s32.totalorder %s20, 3
      %p158 = por %p156, %p157
      %p160 = scmp.ne.s32.totalorder %s143, %s159
      %p161 = scmp.eq.s32.totalorder %s20, 0
      %p162 = por %p160, %p161
      %p163 = scmp.le.s32.totalorder 1, %s14
      %p164 = scmp.lt.s32.totalorder %s14, 5
      %p165 = pnand %p163, %p164
      %p166 = pneg %p165
      // Predicated region
      $region9: #{tpu_custom_call.1} parent=5 // pred_check
        _
      $region10: #{tpu_custom_call.1} parent=5 // pred_check_branch
        %168 = sbr.rel (%p165) target = $region12
      $region11: #{tpu_custom_call.1} parent=5 // pred_region
        %s169 = ssub.s32 %s14, 1
        // Predicated region
        $region13: #{tpu_custom_call.1} parent=11 // pred_check
          %p170 = pneg %p61
        $region14: #{tpu_custom_call.1} parent=11 // pred_check_branch
          %172 = sbr.rel (%p170) target = $region16
        $region15: #{tpu_custom_call.1} parent=11 // pred_region
          _
        $region16: #{tpu_custom_call.1} parent=11 // pred_fallthru
          _
        // Predicated region
        $region17: #{tpu_custom_call.1} parent=11 // pred_check
          %p173 = pneg %p82
        $region18: #{tpu_custom_call.1} parent=11 // pred_check_branch
          %175 = sbr.rel (%p173) target = $region20
        $region19: #{tpu_custom_call.1} parent=11 // pred_region
          _
        $region20: #{tpu_custom_call.1} parent=11 // pred_fallthru
          _
        // Predicated region
        $region21: #{tpu_custom_call.1} parent=11 // pred_check
          %p176 = pneg %p103
        $region22: #{tpu_custom_call.1} parent=11 // pred_check_branch
          %178 = sbr.rel (%p176) target = $region24
        $region23: #{tpu_custom_call.1} parent=11 // pred_region
          _
        $region24: #{tpu_custom_call.1} parent=11 // pred_fallthru
          _
      $region12: #{tpu_custom_call.1} parent=5 // pred_fallthru
        _
      %p179 = scmp.lt.s32.totalorder %s14, 4
      // Predicated region
      $region25: #{tpu_custom_call.1} parent=5 // pred_check
        %p180 = pneg %p179
      $region26: #{tpu_custom_call.1} parent=5 // pred_check_branch
        %182 = sbr.rel (%p180) target = $region28
      $region27: #{tpu_custom_call.1} parent=5 // pred_region
        // Predicated region
        $region29: #{tpu_custom_call.1} parent=27 // pred_check
          %p183 = pneg %p34
        $region30: #{tpu_custom_call.1} parent=27 // pred_check_branch
          %185 = sbr.rel (%p183) target = $region32
        $region31: #{tpu_custom_call.1} parent=27 // pred_region
          %s186 = smul.u32 4, %s14
          %p187 = scmp.lt.s32.totalorder %s186, 15
          %s188 = scalar_select %p187, %s186, 15
          %s189 = smul.addr %s188, 8
          %s190 = scalar_lea.vmem %s0, %s189
          %s191 = smul.u32 4, %s14
        $region32: #{tpu_custom_call.1} parent=27 // pred_fallthru
          _
        // Predicated region
        $region33: #{tpu_custom_call.1} parent=27 // pred_check
          %p192 = pneg %p123
        $region34: #{tpu_custom_call.1} parent=27 // pred_check_branch
          %194 = sbr.rel (%p192) target = $region36
        $region35: #{tpu_custom_call.1} parent=27 // pred_region
          %s195 = smul.u32 16, %s14
          %p196 = scmp.lt.s32.totalorder %s195, 63
          %s197 = scalar_select %p196, %s195, 63
          %s198 = scalar_lea.vmem %s4, %s197
          %s199 = smul.u32 16, %s14
        $region36: #{tpu_custom_call.1} parent=27 // pred_fallthru
          _
      $region28: #{tpu_custom_call.1} parent=5 // pred_fallthru
        _
      %p200 = scmp.le.s32.totalorder 1, %s14
      %p201 = scmp.lt.s32.totalorder %s14, 5
      %p202 = pnand %p200, %p201
      %p203 = pneg %p202
      // Predicated region
      $region37: #{tpu_custom_call.1} parent=5 // pred_check
        _
      $region38: #{tpu_custom_call.1} parent=5 // pred_check_branch
        %205 = sbr.rel (%p202) target = $region40
      $region39: #{tpu_custom_call.1} parent=5 // pred_region
        %s206 = ssub.s32 %s14, 1
        %s207 = smul.u32 4, %s19
        %p208 = scmp.lt.s32.totalorder %s207, 15
        %s209 = scalar_select %p208, %s207, 15
        %s210 = smul.addr %s209, 8
        %s211 = scalar_lea.vmem %s0, %s210
        %p212 = pneg %p40
        %p213 = pneg %p37
        %p214 = pneg %p61
        %p215 = pneg %p58
        %p216 = pneg %p82
        %p217 = pneg %p79
        %p218 = pneg %p103
        %p219 = pneg %p100
        %s220 = smul.u32 16, %s19
        %p221 = scmp.lt.s32.totalorder %s220, 63
        %s222 = scalar_select %p221, %s220, 63
        %s223 = scalar_lea.vmem %s4, %s222
        %p224 = pneg %p129
        %p225 = pneg %p126
        %p226 = pneg %p155
        %p227 = pneg %p152
        %s228 = sand.u32 %s142, 1
        %s229 = scalar_lea.sflag [#allocation3], %s228
        %s230 = sand.u32 %s142, 1
        %s231 = smul.addr %s230, 32
        %s232 = scalar_lea.vmem [#allocation2], %s231
        %s233 = smul.u32 4, %s19
        %p234 = scmp.lt.s32.totalorder %s233, 15
        %s235 = scalar_select %p234, %s233, 15
        %s236 = smul.addr %s235, 8
        %s237 = scalar_lea.vmem %s0, %s236
        %s238 = smul.u32 4, %s19
        %s239 = smul.u32 16, %s19
        %p240 = scmp.lt.s32.totalorder %s239, 63
        %s241 = scalar_select %p240, %s239, 63
        %s242 = scalar_lea.vmem %s4, %s241
        %s243 = smul.u32 16, %s19
        %s244 = smul.u32 4, %s19
        %v245 = vld [vmem:[%s237] sm:$0xff]
        %v246 = vld [vmem:[%s237 + $0x8] sm:$0xff]
        %v247 = vld [vmem:[%s237 + $0x10] sm:$0xff]
        %v248 = vld [vmem:[%s237 + $0x18] sm:$0xff]
        %v249 = vld [vmem:[%s1] sm:$0xff]
        %v250 = vld [vmem:[%s1 + $0x8] sm:$0xff]
        %vm251 = vcmask 130048
        %v253 = vsel %vm251, %v245, 0
        %v256 = vsel %vm251, %v246, 0
        %v259 = vsel %vm251, %v247, 0
        %v262 = vsel %vm251, %v248, 0
        %264 = vmatprep.subr.mxu0 0.0
        %265 = vmatpush1.msra.mxu0 0.0
        %266 = vmatprep.subr.mxu0 0.0
        %267 = vmatpush1.msra.mxu0 0.0
        %268 = vmatprep.subr.mxu0 0.0
        %269 = vmatpush1.msra.mxu0 0.0
        %270 = vmatprep.subr.mxu0 0.0
        %271 = vmatpush1.msra.mxu0 0.0
        %272 = vmatprep.subr.mxu0 0.0
        %273 = vmatpush1.msra.mxu0 0.0
        %274 = vmatprep.subr.mxu0 0.0
        %275 = vmatpush1.msra.mxu0 0.0
        %276 = vmatprep.subr.mxu0 0.0
        %277 = vmatpush1.msra.mxu0 0.0
        %278 = vmatprep.subr.mxu0 0.0
        %279 = vmatpush1.msra.mxu0 0.0
        %280 = vmatprep.subr.mxu0 0.0
        %281 = vmatpush1.msra.mxu0 0.0
        %282 = vmatprep.subr.mxu0 0.0
        %283 = vmatpush1.msra.mxu0 0.0
        %284 = vmatprep.subr.mxu0 0.0
        %285 = vmatpush1.msra.mxu0 0.0
        %286 = vmatprep.subr.mxu0 0.0
        %287 = vmatpush1.msra.mxu0 0.0
        %288 = vmatprep.subr.mxu0 0.0
        %289 = vmatpush1.msra.mxu0 0.0
        %290 = vmatprep.subr.mxu0 0.0
        %291 = vmatpush1.msra.mxu0 0.0
        %292 = vmatprep.subr.mxu0 0.0
        %293 = vmatpush1.msra.mxu0 %v250
        %294 = vmatprep.subr.mxu0 0.0
        %295 = vmatpush1.msra.mxu0 %v249
        %296 = vmatprep.subr.mxu0 0.0
        %297 = vmatpush2.msra.mxu0 0.0
        %298 = vmatprep.subr.mxu0 0.0
        %299 = vmatpush2.msra.mxu0 0.0
        %300 = vmatprep.subr.mxu0 0.0
        %301 = vmatpush2.msra.mxu0 0.0
        %302 = vmatprep.subr.mxu0 0.0
        %303 = vmatpush2.msra.mxu0 0.0
        %304 = vmatprep.subr.mxu0 0.0
        %305 = vmatpush2.msra.mxu0 0.0
        %306 = vmatprep.subr.mxu0 0.0
        %307 = vmatpush2.msra.mxu0 0.0
        %308 = vmatprep.subr.mxu0 0.0
        %309 = vmatpush2.msra.mxu0 0.0
        %310 = vmatprep.subr.mxu0 0.0
        %311 = vmatpush2.msra.mxu0 0.0
        %312 = vmatprep.subr.mxu0 0.0
        %313 = vmatpush2.msra.mxu0 0.0
        %314 = vmatprep.subr.mxu0 0.0
        %315 = vmatpush2.msra.mxu0 0.0
        %316 = vmatprep.subr.mxu0 0.0
        %317 = vmatpush2.msra.mxu0 0.0
        %318 = vmatprep.subr.mxu0 0.0
        %319 = vmatpush2.msra.mxu0 0.0
        %320 = vmatprep.subr.mxu0 0.0
        %321 = vmatpush2.msra.mxu0 0.0
        %322 = vmatprep.subr.mxu0 0.0
        %323 = vmatpush2.msra.mxu0 0.0
        %324 = vmatprep.subr.mxu0 0.0
        %325 = vmatpush2.msra.mxu0 0.0
        %326 = vmatprep.subr.mxu0 0.0
        %327 = vmatpush2.msra.mxu0 0.0
        %328 = vmatprep.mubr.f32.mxu0 0.0
        %329 = vmatmul.mubr.f32.gmra.mxu0 %v253
        %v330 = vpop.f32.mrf.mxu0
        %v331 = vadd.f32 0.0, %v330
        %v332 = vpop.f32.mrf.mxu0
        %333 = vmatprep.mubr.f32.mxu0 0.0
        %334 = vmatmul.mubr.f32.gmra.mxu0 %v256
        %v335 = vpop.f32.mrf.mxu0
        %v336 = vadd.f32 0.0, %v335
        %v337 = vpop.f32.mrf.mxu0
        %338 = vmatprep.mubr.f32.mxu0 0.0
        %339 = vmatmul.mubr.f32.gmra.mxu0 %v259
        %v340 = vpop.f32.mrf.mxu0
        %v341 = vadd.f32 0.0, %v340
        %v342 = vpop.f32.mrf.mxu0
        %343 = vmatprep.mubr.f32.mxu0 0.0
        %344 = vmatmul.mubr.f32.gmra.mxu0 %v262
        %v345 = vpop.f32.mrf.mxu0
        %v346 = vadd.f32 0.0, %v345
        %v347 = vpop.f32.mrf.mxu0
        %348 = vdwg.mxu0
        %349 = vadd.xlane.f32.xlu0 %v331
        %v350 = vpop.xlane.xlu0 %349
        %351 = vadd.xlane.f32.xlu0 %v336
        %v352 = vpop.xlane.xlu0 %351
        %353 = vadd.xlane.f32.xlu0 %v341
        %v354 = vpop.xlane.xlu0 %353
        %355 = vadd.xlane.f32.xlu0 %v346
        %v356 = vpop.xlane.xlu0 %355
        %v357 = vrcp.pop 128.0
        %v358 = vmul.f32 %v350, %v357
        %v359 = vmul.f32 %v352, %v357
        %v360 = vmul.f32 %v354, %v357
        %v361 = vmul.f32 %v356, %v357
        %v362 = vmul.f32 %v331, %v331
        %v363 = vmul.f32 %v336, %v336
        %v364 = vmul.f32 %v341, %v341
        %v365 = vmul.f32 %v346, %v346
        %366 = vadd.xlane.f32.xlu0 %v362
        %v367 = vpop.xlane.xlu0 %366
        %368 = vadd.xlane.f32.xlu0 %v363
        %v369 = vpop.xlane.xlu0 %368
        %370 = vadd.xlane.f32.xlu0 %v364
        %v371 = vpop.xlane.xlu0 %370
        %372 = vadd.xlane.f32.xlu0 %v365
        %v373 = vpop.xlane.xlu0 %372
        %v374 = vmul.f32 %v367, %v357
        %v375 = vmul.f32 %v369, %v357
        %v376 = vmul.f32 %v371, %v357
        %v377 = vmul.f32 %v373, %v357
        %v378 = vmul.f32 %v358, %v358
        %v379 = vmul.f32 %v359, %v359
        %v380 = vmul.f32 %v360, %v360
        %v381 = vmul.f32 %v361, %v361
        %v382 = vsub.f32 %v374, %v378
        %v383 = vsub.f32 %v375, %v379
        %v384 = vsub.f32 %v376, %v380
        %v385 = vsub.f32 %v377, %v381
        %v386 = vsub.f32 %v331, %v358
        %v387 = vsub.f32 %v336, %v359
        %v388 = vsub.f32 %v341, %v360
        %v389 = vsub.f32 %v346, %v361
        %v390 = vadd.f32 %v382, 1e-06
        %v391 = vadd.f32 %v383, 1e-06
        %v392 = vadd.f32 %v384, 1e-06
        %v393 = vadd.f32 %v385, 1e-06
        %v394 = vrsqrt.pop %v390
        %v395 = vrsqrt.pop %v391
        %v396 = vrsqrt.pop %v392
        %v397 = vrsqrt.pop %v393
        %v398 = vmul.f32 %v386, %v394
        %v399 = vmul.f32 %v387, %v395
        %v400 = vmul.f32 %v388, %v396
        %v401 = vmul.f32 %v389, %v397
        %v402 = vld [vmem:[%s242] sm:$0x1]
        %v403 = vld [vmem:[%s242 + $0x1] sm:$0x1]
        %v404 = vld [vmem:[%s242 + $0x2] sm:$0x1]
        %v405 = vld [vmem:[%s242 + $0x3] sm:$0x1]
        %v406 = vld [vmem:[%s242 + $0x4] sm:$0x1]
        %v407 = vld [vmem:[%s242 + $0x5] sm:$0x1]
        %v408 = vld [vmem:[%s242 + $0x6] sm:$0x1]
        %v409 = vld [vmem:[%s242 + $0x7] sm:$0x1]
        %v410 = vld [vmem:[%s242 + $0x8] sm:$0x1]
        %v411 = vld [vmem:[%s242 + $0x9] sm:$0x1]
        %v412 = vld [vmem:[%s242 + $0xa] sm:$0x1]
        %v413 = vld [vmem:[%s242 + $0xb] sm:$0x1]
        %v414 = vld [vmem:[%s242 + $0xc] sm:$0x1]
        %v415 = vld [vmem:[%s242 + $0xd] sm:$0x1]
        %v416 = vld [vmem:[%s242 + $0xe] sm:$0x1]
        %v417 = vld [vmem:[%s242 + $0xf] sm:$0x1]
        %v434 = vlaneseq
        %v435 = vshrl.u32 %v434, 7
        %v436 = vsub.s32 0, %v435
        %v437 = vrot.slane %v402, %v436
        %v438 = vlaneseq
        %v439 = vshrl.u32 %v438, 7
        %v440 = vsub.s32 0, %v439
        %v441 = vrot.slane %v403, %v440
        %v442 = vlaneseq
        %v443 = vshrl.u32 %v442, 7
        %v444 = vsub.s32 0, %v443
        %v445 = vrot.slane %v404, %v444
        %v446 = vlaneseq
        %v447 = vshrl.u32 %v446, 7
        %v448 = vsub.s32 0, %v447
        %v449 = vrot.slane %v405, %v448
        %v450 = vlaneseq
        %v451 = vshrl.u32 %v450, 7
        %v452 = vsub.s32 0, %v451
        %v453 = vrot.slane %v406, %v452
        %v454 = vlaneseq
        %v455 = vshrl.u32 %v454, 7
        %v456 = vsub.s32 0, %v455
        %v457 = vrot.slane %v407, %v456
        %v458 = vlaneseq
        %v459 = vshrl.u32 %v458, 7
        %v460 = vsub.s32 0, %v459
        %v461 = vrot.slane %v408, %v460
        %v462 = vlaneseq
        %v463 = vshrl.u32 %v462, 7
        %v464 = vsub.s32 0, %v463
        %v465 = vrot.slane %v409, %v464
        %v466 = vlaneseq
        %v467 = vshrl.u32 %v466, 7
        %v468 = vsub.s32 0, %v467
        %v469 = vrot.slane %v410, %v468
        %v470 = vlaneseq
        %v471 = vshrl.u32 %v470, 7
        %v472 = vsub.s32 0, %v471
        %v473 = vrot.slane %v411, %v472
        %v474 = vlaneseq
        %v475 = vshrl.u32 %v474, 7
        %v476 = vsub.s32 0, %v475
        %v477 = vrot.slane %v412, %v476
        %v478 = vlaneseq
        %v479 = vshrl.u32 %v478, 7
        %v480 = vsub.s32 0, %v479
        %v481 = vrot.slane %v413, %v480
        %v482 = vlaneseq
        %v483 = vshrl.u32 %v482, 7
        %v484 = vsub.s32 0, %v483
        %v485 = vrot.slane %v414, %v484
        %v486 = vlaneseq
        %v487 = vshrl.u32 %v486, 7
        %v488 = vsub.s32 0, %v487
        %v489 = vrot.slane %v415, %v488
        %v490 = vlaneseq
        %v491 = vshrl.u32 %v490, 7
        %v492 = vsub.s32 0, %v491
        %v493 = vrot.slane %v416, %v492
        %v494 = vlaneseq
        %v495 = vshrl.u32 %v494, 7
        %v496 = vsub.s32 0, %v495
        %v497 = vrot.slane %v417, %v496
        %v498 = vld [vmem:[%s2] sm:$0x1]
        %v500 = vlaneseq
        %v501 = vshrl.u32 %v500, 7
        %v502 = vsub.s32 0, %v501
        %v503 = vrot.slane %v498, %v502
        %v505 = vmul.f32 %v398, %v503
        %v506 = vmul.f32 %v399, %v503
        %v507 = vmul.f32 %v400, %v503
        %v508 = vmul.f32 %v401, %v503
        %v509 = vld [vmem:[%s3] sm:$0x1]
        %v511 = vlaneseq
        %v512 = vshrl.u32 %v511, 7
        %v513 = vsub.s32 0, %v512
        %v514 = vrot.slane %v509, %v513
        %v516 = vadd.f32 %v505, %v514
        %v517 = vadd.f32 %v506, %v514
        %v518 = vadd.f32 %v507, %v514
        %v519 = vadd.f32 %v508, %v514
        %v520 = vcombine.low %v437, %v441
        %v521 = vcombine.low %v445, %v449
        %v523 = vunpack.c.l.s4 1983009808
        %v524 = vunpack.c.0.s8 %v523
        %v525 = vlaneseq
        %v526 = vshrl.u32 %v525, 7
        %v527 = vsub.s32 %v524, %v526
        %v528 = vrot.slane %v520, %v527
        %v530 = vunpack.c.l.s4 1983009808
        %v531 = vunpack.c.0.s8 %v530
        %v532 = vlaneseq
        %v533 = vshrl.u32 %v532, 7
        %v534 = vsub.s32 %v531, %v533
        %v535 = vrot.slane %v521, %v534
        %v536 = vcombine.low %v528, %v535
        %v537 = vcombine.low %v453, %v457
        %v538 = vcombine.low %v461, %v465
        %v540 = vunpack.c.l.s4 1983009808
        %v541 = vunpack.c.0.s8 %v540
        %v542 = vlaneseq
        %v543 = vshrl.u32 %v542, 7
        %v544 = vsub.s32 %v541, %v543
        %v545 = vrot.slane %v537, %v544
        %v547 = vunpack.c.l.s4 1983009808
        %v548 = vunpack.c.0.s8 %v547
        %v549 = vlaneseq
        %v550 = vshrl.u32 %v549, 7
        %v551 = vsub.s32 %v548, %v550
        %v552 = vrot.slane %v538, %v551
        %v553 = vcombine.low %v545, %v552
        %v554 = vcombine.low %v469, %v473
        %v555 = vcombine.low %v477, %v481
        %v557 = vunpack.c.l.s4 1983009808
        %v558 = vunpack.c.0.s8 %v557
        %v559 = vlaneseq
        %v560 = vshrl.u32 %v559, 7
        %v561 = vsub.s32 %v558, %v560
        %v562 = vrot.slane %v554, %v561
        %v564 = vunpack.c.l.s4 1983009808
        %v565 = vunpack.c.0.s8 %v564
        %v566 = vlaneseq
        %v567 = vshrl.u32 %v566, 7
        %v568 = vsub.s32 %v565, %v567
        %v569 = vrot.slane %v555, %v568
        %v570 = vcombine.low %v562, %v569
        %v571 = vcombine.low %v485, %v489
        %v572 = vcombine.low %v493, %v497
        %v574 = vunpack.c.l.s4 1983009808
        %v575 = vunpack.c.0.s8 %v574
        %v576 = vlaneseq
        %v577 = vshrl.u32 %v576, 7
        %v578 = vsub.s32 %v575, %v577
        %v579 = vrot.slane %v571, %v578
        %v581 = vunpack.c.l.s4 1983009808
        %v582 = vunpack.c.0.s8 %v581
        %v583 = vlaneseq
        %v584 = vshrl.u32 %v583, 7
        %v585 = vsub.s32 %v582, %v584
        %v586 = vrot.slane %v572, %v585
        %v587 = vcombine.low %v579, %v586
        %v592 = vadd.f32 %v516, %v536
        %v593 = vadd.f32 %v517, %v553
        %v594 = vadd.f32 %v518, %v570
        %v595 = vadd.f32 %v519, %v587
        %596 = vst [vmem:[%s232] sm:$0xff] %v592
        %597 = vst [vmem:[%s232 + $0x8] sm:$0xff] %v593
        %598 = vst [vmem:[%s232 + $0x10] sm:$0xff] %v594
        %599 = vst [vmem:[%s232 + $0x18] sm:$0xff] %v595
        %s600 = sand.u32 %s142, 1
        %s601 = scalar_lea.sflag [#allocation3], %s600
        %s602 = sand.u32 %s142, 1
        %s603 = smul.addr %s602, 32
        %s604 = scalar_lea.vmem [#allocation2], %s603
        // Predicated region
        $region41: #{tpu_custom_call.1} parent=39 // pred_check
          %p605 = pneg %p152
        $region42: #{tpu_custom_call.1} parent=39 // pred_check_branch
          %607 = sbr.rel (%p605) target = $region44
        $region43: #{tpu_custom_call.1} parent=39 // pred_region
          %s608 = smul.u32 4, %s19
          %s610 = ssub.s32 512, 512
          %611 = vsyncadd %s601, %s610
          %s612 = smul.addr %s608, 128
          %s613 = scalar_lea.hbm %s5, %s612
          %s614 = sshll.u32 %s604, 4
          %s615 = int_to_ptr.vmem [resolvable:$true] %s614
          %620 = dma.vmem_to_hbm [thread:$0]  %s615, 512, %s613, %s601, 128, 128, 8
        $region44: #{tpu_custom_call.1} parent=39 // pred_fallthru
          _
      $region40: #{tpu_custom_call.1} parent=5 // pred_fallthru
        _
      %p621 = scmp.le.s32.totalorder 2, %s14
      // Predicated region
      $region45: #{tpu_custom_call.1} parent=5 // pred_check
        %p622 = pneg %p621
      $region46: #{tpu_custom_call.1} parent=5 // pred_check_branch
        %624 = sbr.rel (%p622) target = $region48
      $region47: #{tpu_custom_call.1} parent=5 // pred_region
        %s625 = ssub.s32 %s14, 2
        // Predicated region
        $region49: #{tpu_custom_call.1} parent=47 // pred_check
          %p626 = pneg %p158
        $region50: #{tpu_custom_call.1} parent=47 // pred_check_branch
          %628 = sbr.rel (%p626) target = $region52
        $region51: #{tpu_custom_call.1} parent=47 // pred_region
          %s629 = sand.u32 %s143, 1
          %s630 = scalar_lea.sflag [#allocation3], %s629
          %s631 = sand.u32 %s143, 1
          %s632 = smul.addr %s631, 32
          %s633 = scalar_lea.vmem [#allocation2], %s632
          %634 = dma.done %s630, 512
        $region52: #{tpu_custom_call.1} parent=47 // pred_fallthru
          _
      $region48: #{tpu_custom_call.1} parent=5 // pred_fallthru
        _
    $region6: #{tpu_custom_call.1} parent=1 // loop_footer
      %s18 = sadd.s32 1, %s14
    $region7: #{tpu_custom_call.1} parent=1 // loop_footer_branch
      %13 = sbr.rel target = $region3
    $region8: #{tpu_custom_call.1} parent=1 // loop_exit
      _
    %635 = vsyncpa [#allocation3], 1
    %s636 = scalar_lea.sflag [#allocation3], 1
    %637 = vsyncpa %s636, 1

</llo_original>
